<compile_context>
chip_gen: v6e
topology: v6e:2x2x1
jax: 0.10.0
libtpu: 0.0.40
codegen_flags: <defaults>
</compile_context>

<pallas_src>
import math

import jax
import jax.numpy as jnp
from jax.experimental import pallas as pl
from jax.experimental.pallas import tpu as pltpu


_LANES = 128
_TARGET_BLOCK_BYTES = 2 * 1024 * 1024   # ~2 MiB per block => ~8 MiB VMEM w/ dbl-buf
_SMALL_BYTES = 4 * 1024 * 1024          # ragged tensors up to this go as one block


def _copy_kernel(x_ref, o_ref):
    # forward(x) == x : pure pass-through.
    o_ref[...] = x_ref[...]


def _whole_block_copy(x_flat: jax.Array) -> jax.Array:
    """Grid-less single-block identity copy (small / ragged tensors)."""
    return pl.pallas_call(
        _copy_kernel,
        out_shape=jax.ShapeDtypeStruct(x_flat.shape, x_flat.dtype),
        input_output_aliases={0: 0},
    )(x_flat)


def _lane_dense_copy(x2d: jax.Array) -> jax.Array:
    """Tiled identity copy over a (rows, 128) lane-dense slab."""
    rows, lanes = x2d.shape
    itemsize = jnp.dtype(x2d.dtype).itemsize

    # dtype-aware minimum sublane count: 8 (32-bit), 16 (bf16), 32 (int8/fp8).
    min_sub = max(8, 32 // itemsize)

    # ~2 MiB blocks, rounded down to a multiple of the minimum sublane tile.
    target_rows = max(min_sub, _TARGET_BLOCK_BYTES // (lanes * itemsize))
    target_rows = (target_rows // min_sub) * min_sub

    if rows <= target_rows:
        # Small input: one full-extent block, no pipeline/grid overhead.
        row_tile = rows
    else:
        row_tile = target_rows

    grid = (pl.cdiv(rows, row_tile),)

    return pl.pallas_call(
        _copy_kernel,
        out_shape=jax.ShapeDtypeStruct((rows, lanes), x2d.dtype),
        grid_spec=pltpu.PrefetchScalarGridSpec(
            num_scalar_prefetch=0,
            grid=grid,
            in_specs=[pl.BlockSpec((row_tile, lanes), lambda i: (i, 0))],
            out_specs=pl.BlockSpec((row_tile, lanes), lambda i: (i, 0)),
        ),
        input_output_aliases={0: 0},
        compiler_params=pltpu.CompilerParams(
            dimension_semantics=("parallel",),
            vmem_limit_bytes=32 * 1024 * 1024,
        ),
    )(x2d)


def attention_forward(x: jax.Array) -> jax.Array:
    """Pallas equivalent of Attention.forward(): returns x unchanged."""
    shape, dtype = x.shape, x.dtype
    total = int(math.prod(shape)) if len(shape) > 0 else 1
    if total == 0:
        return x
    itemsize = jnp.dtype(dtype).itemsize

    if total % _LANES == 0:
        # Common path: lane-dense (rows, 128) slab, no padding, no slicing.
        rows = total // _LANES
        out2d = _lane_dense_copy(x.reshape(rows, _LANES))
        return out2d.reshape(shape)

    if total * itemsize <= _SMALL_BYTES:
        # Ragged but small: single full-extent 1-D block, no padding.
        return _whole_block_copy(x.reshape(total)).reshape(shape)

    # Rare: large AND not a multiple of 128 lanes.  Pad once as a last resort.
    # TODO(synk): replace with an in-kernel masked pltpu.store on the tail block
    # to avoid the extra HBM pass from pad/slice.
    pad = (-total) % _LANES
    x1d = jnp.pad(x.reshape(total), (0, pad))
    out2d = _lane_dense_copy(x1d.reshape((total + pad) // _LANES, _LANES))
    return out2d.reshape(-1)[:total].reshape(shape)


if __name__ == "__main__":
    key = jax.random.PRNGKey(0)

    # Primary small test consistent with the module's usage (NCHW conv-ish input).
    x = jax.random.normal(key, (2, 4, 16, 16), dtype=jnp.float32)
    out = jax.block_until_ready(attention_forward(x))
    assert out.shape == x.shape and out.dtype == x.dtype
    assert bool(jnp.all(out == x))

    # Exercise the multi-block tiled path (4 MiB f32 -> 2 grid steps).
    k1, k2, k3 = jax.random.split(key, 3)
    x_big = jax.random.normal(k1, (16, 64, 32, 32), dtype=jnp.float32)
    out_big = jax.block_until_ready(attention_forward(x_big))
    assert bool(jnp.all(out_big == x_big))

    # Exercise bf16 (dtype-aware sublane path, full-extent block).
    x_bf16 = jax.random.normal(k2, (4, 4, 16, 16), dtype=jnp.bfloat16)
    out_bf16 = jax.block_until_ready(attention_forward(x_bf16))
    assert bool(jnp.all(out_bf16 == x_bf16))

    # Exercise the ragged small path (flat length not a multiple of 128).
    x_ragged = jax.random.normal(k3, (3, 5, 7), dtype=jnp.float32)
    out_ragged = jax.block_until_ready(attention_forward(x_ragged))
    assert bool(jnp.all(out_ragged == x_ragged))

    print("KERNEL_OK")
</pallas_src>

<mosaic_0001>
module attributes {stable_mosaic.version = 11 : i64} {
  func.func @_copy_kernel(%arg0: i32, %arg1: memref<16x128xf32, #tpu.memory_space<vmem>>, %arg2: memref<16x128xf32, #tpu.memory_space<vmem>>) attributes {dimension_semantics = [#tpu.dimension_semantics<parallel>], iteration_bounds = array<i64: 1>, scalar_prefetch = 0 : i64, scratch_operands = 0 : i64, tpu.core_type = #tpu.core_type<tc>, window_params = [{transform_indices = @transform_0, window_bounds = array<i64: 16, 128>}, {transform_indices = @transform_1, window_bounds = array<i64: 16, 128>}]} {
    %c0 = arith.constant 0 : index
    %c0_0 = arith.constant 0 : index
    %0 = vector.load %arg1[%c0, %c0_0] : memref<16x128xf32, #tpu.memory_space<vmem>>, vector<16x128xf32>
    %c0_1 = arith.constant 0 : index
    %c0_2 = arith.constant 0 : index
    %1 = vector.load %arg2[%c0_1, %c0_2] : memref<16x128xf32, #tpu.memory_space<vmem>>, vector<16x128xf32>
    tpu.vector_store %arg2[%c0_1, %c0_2], %0 {strides = array<i32>} : memref<16x128xf32, #tpu.memory_space<vmem>>, vector<16x128xf32>,
    return
  }
  func.func @transform_0(%arg0: i32) -> (i32, i32) {
    %c0_i32 = arith.constant 0 : i32
    %c0_i32_0 = arith.constant 0 : i32
    return %arg0, %c0_i32 : i32, i32
  }
  func.func @transform_1(%arg0: i32) -> (i32, i32) {
    %c0_i32 = arith.constant 0 : i32
    %c0_i32_0 = arith.constant 0 : i32
    return %arg0, %c0_i32 : i32, i32
  }
}

</mosaic_0001>

<llo_original>
// kernel: tpu_custom_call.1
$region0: #{tpu_custom_call.1}
  #allocation0 [shape = 'u32[]', space=smem, size = 0x4, offset = 0x4, fixed_abs, tag = 'smem constant byte address 0x4 - core index']
  #allocation1 [shape = 'u32[144,128]{1,0:T(1,128)}', space=vmem, size = 0x12000, scoped, tag = 'internal scratch']
  %s0 = inlined_call_operand.hbm [shape: f32[16,128], index: 0, kind: input, shape index: {}, may-alias: {0,1}]
  %s1 = inlined_call_operand.hbm [shape: f32[16,128], index: 1, kind: output, shape index: {}, may-alias: {0,1}]
  %s2 = sld [smem:[#allocation0]]
  $region18: #{tpu_custom_call.1} parent=0
    _
  %s4 = ssub.s32 1, %s2
  %s5 = scalar_select 0, %s4, %s2
  $region1: #{tpu_custom_call.1} parent=0
    #allocation2 [shape = 'u8[8192]{0}', space=vmem, size = 0x2000, scoped, tag = 'input window, operand 0, single buffered']
    #allocation3 [shape = 's32[1]{0}', space=sflag, size = 0x4, scoped, tag = 'scoped memory for tpu_custom_call.1']
    #allocation4 [shape = 's32[1]{0}', space=sflag, size = 0x4, scoped, tag = 'scoped memory for tpu_custom_call.1']
    #allocation5 [shape = 'u8[8192]{0}', space=vmem, size = 0x2000, scoped, tag = 'output window, operand 0, single buffered']
    %6 = vsyncpa [#allocation3], 0
    %7 = vsyncpa [#allocation4], 0
    // Predicated region
    $region2: #{tpu_custom_call.1} parent=1 // pred_check
      _
    $region3: #{tpu_custom_call.1} parent=1 // pred_check_branch
      %9 = sbr.rel (0) target = $region5
    $region4: #{tpu_custom_call.1} parent=1 // pred_region
      %s11 = ssub.s32 256, 256
      %12 = vsyncadd [#allocation3], %s11
      %s13 = sshll.u32 [#allocation2], 4
      %s14 = int_to_ptr.vmem [resolvable:$true] %s13
      %19 = dma.hbm_to_vmem [thread:$0]  %s0, 256, %s14, [#allocation3], 128, 128, 8
    $region5: #{tpu_custom_call.1} parent=1 // pred_fallthru
      _
    // Predicated region
    $region6: #{tpu_custom_call.1} parent=1 // pred_check
      _
    $region7: #{tpu_custom_call.1} parent=1 // pred_check_branch
      %21 = sbr.rel (0) target = $region9
    $region8: #{tpu_custom_call.1} parent=1 // pred_region
      %22 = dma.done [#allocation3], 256
    $region9: #{tpu_custom_call.1} parent=1 // pred_fallthru
      _
    %v23 = vld [vmem:[#allocation2] sm:$0xff]
    %v24 = vld [vmem:[#allocation2 + $0x8] sm:$0xff]
    %25 = vst [vmem:[#allocation5] sm:$0xff] %v23
    %26 = vst [vmem:[#allocation5 + $0x8] sm:$0xff] %v24
    // Predicated region
    $region10: #{tpu_custom_call.1} parent=1 // pred_check
      _
    $region11: #{tpu_custom_call.1} parent=1 // pred_check_branch
      %28 = sbr.rel (0) target = $region13
    $region12: #{tpu_custom_call.1} parent=1 // pred_region
      %s30 = ssub.s32 256, 256
      %31 = vsyncadd [#allocation4], %s30
      %s32 = sshll.u32 [#allocation5], 4
      %s33 = int_to_ptr.vmem [resolvable:$true] %s32
      %38 = dma.vmem_to_hbm [thread:$0]  %s33, 256, %s1, [#allocation4], 128, 128, 8
    $region13: #{tpu_custom_call.1} parent=1 // pred_fallthru
      _
    // Predicated region
    $region14: #{tpu_custom_call.1} parent=1 // pred_check
      _
    $region15: #{tpu_custom_call.1} parent=1 // pred_check_branch
      %40 = sbr.rel (0) target = $region17
    $region16: #{tpu_custom_call.1} parent=1 // pred_region
      %41 = dma.done [#allocation4], 256
    $region17: #{tpu_custom_call.1} parent=1 // pred_fallthru
      _
    %42 = vsyncpa [#allocation3], 1
    %43 = vsyncpa [#allocation4], 1

</llo_original>
